<compile_context>
chip_gen: v6e
topology: v6e:2x2x1
jax: 0.10.0
libtpu: 0.0.40
codegen_flags: <defaults>
</compile_context>

<pallas_src>
import functools

import jax
import jax.numpy as jnp
import numpy as np
from jax.experimental import pallas as pl
from jax.experimental.pallas import tpu as pltpu

KSIZE = 3  # Conv1d kernel_size


# ------------------------------ kernel body ----------------------------------
def convblock_kernel(x_ref, w1_ref, b1_ref, w2_ref, b2_ref, o_ref, taps_ref,
                     *, seq_len):
    """One (C, B_tile * L) slab per grid step (batch packed along lanes).

    x_ref:    (C, BL)   input slab, BL = B_tile * L       (compute dtype)
    w*_ref:   (C, 3*C)  conv weights, BN scale folded in, tap-major columns
    b*_ref:   (C, 1)    folded shift = beta + (conv_bias - mean) * scale (f32)
    o_ref:    (C, BL)   output slab
    taps_ref: (3*C, BL) VMEM scratch holding the stacked conv operand
    """
    L = seq_len
    C, BL = x_ref.shape
    cdt = x_ref.dtype
    x = x_ref[...]

    # Edge masks, built once per grid step at full (C, BL) shape and reused by
    # both tap stackings (JAX does not CSE broadcast_in_dim).
    pos = jax.lax.broadcasted_iota(jnp.int32, (C, BL), 1) % L
    not_start = pos != 0          # left neighbour stays inside the sequence
    not_end = pos != (L - 1)      # right neighbour stays inside the sequence

    def stack_taps(h):
        # (3*C, BL) stacked operand of a k=3, pad=1 conv, written into the
        # shared VMEM scratch:
        #   rows [0:C)   -> h shifted right by one (x[l-1], zero at l == 0)
        #   rows [C:2C)  -> h                       (x[l])
        #   rows [2C:3C) -> h shifted left by one   (x[l+1], zero at l == L-1)
        # The circular roll runs over the whole B_tile*L lane axis (XLU slot,
        # essentially free next to the MXU work); the edge mask also kills any
        # value that leaked across a sequence boundary inside the block.
        taps_ref[0:C, :] = jnp.where(not_start, pltpu.roll(h, shift=1, axis=1), 0.0)
        taps_ref[C:2 * C, :] = h
        taps_ref[2 * C:3 * C, :] = jnp.where(not_end,
                                             pltpu.roll(h, shift=BL - 1, axis=1), 0.0)

    # --- Conv1d #1 + BN1 (scale folded into w1) + ReLU: one MXU matmul -------
    stack_taps(x)
    h1 = jnp.dot(w1_ref[...], taps_ref[...], preferred_element_type=jnp.float32)
    h1 = jnp.maximum(h1 + b1_ref[...], 0.0)

    # --- Conv1d #2 + BN2 ------------------------------------------------------
    # Note: on v5e (no bf16 VPU) the auto compute dtype stays f32, so this cast
    # is a no-op there; on v6e/v7x the bf16 cast feeds the bf16-native MXU.
    stack_taps(h1.astype(cdt))
    h2 = jnp.dot(w2_ref[...], taps_ref[...], preferred_element_type=jnp.float32)
    h2 = h2 + b2_ref[...]

    # --- residual add (downsample is None -> residual = x) + ReLU ------------
    o_ref[...] = jnp.maximum(h2 + x.astype(jnp.float32), 0.0).astype(o_ref.dtype)


# --------------------------- hardware introspection --------------------------
def _device_kind():
    try:
        return jax.devices()[0].device_kind.lower()
    except Exception:  # pragma: no cover - CPU / interpret fallbacks
        return ""


def _is_v7x():
    return "v7" in _device_kind()


def _default_compute_dtype():
    # bf16 MXU + bf16 VPU on v6e / v7x; v5e has no bf16 VPU -> keep f32 there.
    dk = _device_kind()
    if ("v6" in dk) or ("v7" in dk):
        return jnp.bfloat16
    return jnp.float32


def _vmem_capacity_bytes():
    try:
        return int(pltpu.get_tpu_info().vmem_capacity_bytes)
    except Exception:  # pragma: no cover - be conservative (v7x per-TC VMEM)
        return 64 * 1024 * 1024


# ------------------------------ tile selection --------------------------------
def _per_batch_elem_vmem_bytes(channels, length, in_itemsize, out_itemsize):
    # Live VMEM per batch element in a tile:
    #   2x input slab   (double-buffered)        2 * C*L*in
    #   2x output slab  (double-buffered)        2 * C*L*out
    #   stacked-taps scratch (single-buffered)   3 * C*L*in
    #   f32 intermediates (h1, h2, residual)     3 * C*L*4
    #   edge masks / vreg headroom               2 * C*L*4
    return channels * length * (5 * in_itemsize + 2 * out_itemsize + 5 * 4)


def _validate_block_batch(bt, n_batch, length):
    assert bt >= 1 and n_batch % bt == 0, (
        f"block_batch={bt} must divide the batch size {n_batch}")
    assert bt == n_batch or (bt * length) % 128 == 0, (
        f"block_batch*L = {bt * length} must be a multiple of 128 "
        f"(or the block must cover the full batch)")


def _pick_batch_tile(n_batch, channels, length, in_itemsize, out_itemsize,
                     vmem_budget, min_grid=1):
    """Largest whole-sequence batch tile whose full per-step VMEM footprint
    (double-buffered in/out slabs + taps scratch + f32 intermediates) fits the
    budget, while honouring the 128-lane rule and (when requested) a minimum
    number of grid steps so both v7x TensorCores get work."""
    per_elem = _per_batch_elem_vmem_bytes(channels, length, in_itemsize, out_itemsize)
    valid = [bt for bt in range(n_batch, 0, -1)
             if n_batch % bt == 0
             and (bt == n_batch or (bt * length) % 128 == 0)]
    fitting = [bt for bt in valid if bt * per_elem <= vmem_budget] or [valid[-1]]
    best = fitting[0]                       # largest fitting tile
    if n_batch // best < min_grid:          # shrink only if we must (v7x)
        for bt in fitting:                  # descending order
            if n_batch // bt >= min_grid:
                best = bt
                break
    return best


def _const_block_spec(shape):
    """Grid-constant operand: single-buffer it when this jax supports it."""
    index_map = lambda n: (0, 0)
    try:
        return pl.BlockSpec(shape, index_map, pipeline_mode=pl.Buffered(1))
    except (TypeError, AttributeError):  # older jax: fall back to default
        return pl.BlockSpec(shape, index_map)


# ------------------------------ public wrappers --------------------------------
def conv_block_pallas_lanedense(x_cl, params, *, n_batch, seq_len, eps=1e-5,
                                compute_dtype=None, out_dtype=jnp.float32,
                                block_batch=None):
    """Lane-dense entry point: x_cl has shape (C, N*L) (batch packed on lanes).

    Use this across a full VDCNN stack and convert NCL <-> (C, N*L) only once
    at the network boundary; the layout transposes are pure extra HBM passes.
    """
    C, NL = x_cl.shape
    N, L = n_batch, seq_len
    assert NL == N * L, f"x_cl has {NL} lanes, expected n_batch*seq_len={N * L}"
    f32 = jnp.float32
    cdt = compute_dtype if compute_dtype is not None else _default_compute_dtype()

    # ---- host-side folding: BN scale into weights, bias + mean into shift ---
    def fold(w, bias, gamma, beta, mean, var):
        scale = gamma / jnp.sqrt(var + eps)                         # (C,)
        # (C_out, C_in, K) * scale -> (C_out, K, C_in) -> (C_out, 3*C_in)
        w_f = (w * scale[:, None, None]).transpose(0, 2, 1).reshape(C, KSIZE * C)
        shift = beta + (bias - mean) * scale
        return w_f.astype(cdt), shift.reshape(C, 1).astype(f32)

    w1, b1 = fold(params["w1"], params["b1"], params["g1"], params["beta1"],
                  params["m1"], params["v1"])
    w2, b2 = fold(params["w2"], params["b2"], params["g2"], params["beta2"],
                  params["m2"], params["v2"])

    x_c = x_cl.astype(cdt)

    in_isz = jnp.dtype(cdt).itemsize
    out_isz = jnp.dtype(out_dtype).itemsize

    # Generation-aware VMEM budgeting (v7x: 64 MiB physical, v5e/v6e: 128 MiB).
    vmem_cap = _vmem_capacity_bytes()
    vmem_limit = max(32 << 20, min(int(0.7 * vmem_cap), vmem_cap))
    min_grid = 2 if _is_v7x() else 1        # keep both v7x TensorCores busy

    if block_batch is None:
        bt = _pick_batch_tile(N, C, L, in_isz, out_isz, vmem_limit, min_grid)
    else:
        bt = block_batch
    _validate_block_batch(bt, N, L)
    BL = bt * L
    grid = (N // bt,)

    kernel = functools.partial(convblock_kernel, seq_len=L)

    cost = pl.CostEstimate(
        flops=int(2 * 2 * C * (KSIZE * C) * NL + 6 * C * NL),
        transcendentals=0,
        bytes_accessed=int(C * NL * (in_isz + out_isz)
                           + 2 * (C * KSIZE * C + C) * 4),
    )

    return pl.pallas_call(
        kernel,
        out_shape=jax.ShapeDtypeStruct((C, NL), out_dtype),
        grid_spec=pltpu.PrefetchScalarGridSpec(
            num_scalar_prefetch=0,
            grid=grid,
            in_specs=[
                pl.BlockSpec((C, BL), lambda n: (0, n)),      # x slab
                _const_block_spec((C, KSIZE * C)),            # w1 (grid-const)
                _const_block_spec((C, 1)),                    # shift1
                _const_block_spec((C, KSIZE * C)),            # w2 (grid-const)
                _const_block_spec((C, 1)),                    # shift2
            ],
            out_specs=pl.BlockSpec((C, BL), lambda n: (0, n)),
            scratch_shapes=[pltpu.VMEM((KSIZE * C, BL), cdt)],  # stacked taps
        ),
        compiler_params=pltpu.CompilerParams(
            dimension_semantics=("parallel",),
            vmem_limit_bytes=int(vmem_limit),
        ),
        cost_estimate=cost,
    )(x_c, w1, b1, w2, b2)


def conv_block_pallas(x, params, eps=1e-5, compute_dtype=None,
                      out_dtype=None, block_batch=None):
    """PyTorch-layout entry point: x has shape (N, C, L).

    Note: the NCL <-> lane-dense transposes here are extra HBM passes; for a
    full VDCNN stack call conv_block_pallas_lanedense directly and convert
    layouts once at the network boundary.
    """
    N, C, L = x.shape
    x_cl = jnp.transpose(x, (1, 0, 2)).reshape(C, N * L)
    out_cl = conv_block_pallas_lanedense(
        x_cl, params, n_batch=N, seq_len=L, eps=eps,
        compute_dtype=compute_dtype,
        out_dtype=jnp.float32 if out_dtype is None else out_dtype,
        block_batch=block_batch)
    return out_cl.reshape(C, N, L).transpose(1, 0, 2).astype(x.dtype)


# -------------------- pure-JAX reference (for verification) ------------------
def conv_block_ref(x, params, eps=1e-5):
    def conv1d(h, w, b):
        y = jax.lax.conv_general_dilated(
            h, w, window_strides=(1,), padding=[(1, 1)],
            dimension_numbers=("NCH", "OIH", "NCH"),
            precision=jax.lax.Precision.HIGHEST)
        return y + b[None, :, None]

    def bn(h, g, beta, m, v):
        return (h - m[None, :, None]) / jnp.sqrt(v[None, :, None] + eps) \
               * g[None, :, None] + beta[None, :, None]

    out = conv1d(x, params["w1"], params["b1"])
    out = jnp.maximum(bn(out, params["g1"], params["beta1"],
                         params["m1"], params["v1"]), 0.0)
    out = conv1d(out, params["w2"], params["b2"])
    out = bn(out, params["g2"], params["beta2"], params["m2"], params["v2"])
    return jnp.maximum(out + x, 0.0)


if __name__ == "__main__":
    # Small VDCNN-style shapes.  C=16 / L=16 / N=16 keep every tile aligned
    # (bt=8 -> 128-lane blocks and >=2 grid steps; C sublane-aligned for f32
    # and bf16).
    N, C, L = 16, 16, 16

    key = jax.random.PRNGKey(0)
    keys = jax.random.split(key, 13)

    params = {
        "w1": 0.1 * jax.random.normal(keys[0], (C, C, KSIZE), jnp.float32),
        "b1": 0.1 * jax.random.normal(keys[1], (C,), jnp.float32),
        "g1": 1.0 + 0.1 * jax.random.normal(keys[2], (C,), jnp.float32),
        "beta1": 0.1 * jax.random.normal(keys[3], (C,), jnp.float32),
        "m1": 0.1 * jax.random.normal(keys[4], (C,), jnp.float32),
        "v1": jax.random.uniform(keys[5], (C,), jnp.float32, 0.5, 1.5),
        "w2": 0.1 * jax.random.normal(keys[6], (C, C, KSIZE), jnp.float32),
        "b2": 0.1 * jax.random.normal(keys[7], (C,), jnp.float32),
        "g2": 1.0 + 0.1 * jax.random.normal(keys[8], (C,), jnp.float32),
        "beta2": 0.1 * jax.random.normal(keys[9], (C,), jnp.float32),
        "m2": 0.1 * jax.random.normal(keys[10], (C,), jnp.float32),
        "v2": jax.random.uniform(keys[11], (C,), jnp.float32, 0.5, 1.5),
    }
    x = jax.random.normal(keys[12], (N, C, L), jnp.float32)

    ref = jax.block_until_ready(conv_block_ref(x, params))

    # f32 path: tight numerical check.
    out_f32 = jax.block_until_ready(
        conv_block_pallas(x, params, compute_dtype=jnp.float32))
    np.testing.assert_allclose(np.asarray(out_f32), np.asarray(ref),
                               rtol=5e-4, atol=5e-4)

    # Default path: bf16 matmul operands on v6e/v7x (f32 MXU accumulation and
    # f32 post-ops), f32 on v5e.  Looser tolerance covers the bf16 case.
    out_auto = jax.block_until_ready(conv_block_pallas(x, params))
    np.testing.assert_allclose(np.asarray(out_auto), np.asarray(ref),
                               rtol=5e-2, atol=5e-2)

    # Explicit bf16 path (fast path on the bf16-native MXUs).
    out_bf16 = jax.block_until_ready(
        conv_block_pallas(x, params, compute_dtype=jnp.bfloat16))
    np.testing.assert_allclose(np.asarray(out_bf16), np.asarray(ref),
                               rtol=5e-2, atol=5e-2)

    print("KERNEL_OK")
</pallas_src>

<mosaic_0001>
module attributes {stable_mosaic.version = 11 : i64} {
  func.func @convblock_kernel(%arg0: i32, %arg1: memref<16x256xf32, #tpu.memory_space<vmem>>, %arg2: memref<16x48xf32, #tpu.memory_space<vmem>>, %arg3: memref<16x1xf32, #tpu.memory_space<vmem>>, %arg4: memref<16x48xf32, #tpu.memory_space<vmem>>, %arg5: memref<16x1xf32, #tpu.memory_space<vmem>>, %arg6: memref<16x256xf32, #tpu.memory_space<vmem>>, %arg7: memref<48x256xf32, #tpu.memory_space<vmem>>) attributes {dimension_semantics = [#tpu.dimension_semantics<parallel>], iteration_bounds = array<i64: 1>, scalar_prefetch = 0 : i64, scratch_operands = 1 : i64, tpu.core_type = #tpu.core_type<tc>, window_params = [{transform_indices = @transform_0, window_bounds = array<i64: 16, 256>}, {pipeline_mode = #tpu.pipeline_mode<synchronous>, transform_indices = @transform_1, window_bounds = array<i64: 16, 48>}, {pipeline_mode = #tpu.pipeline_mode<synchronous>, transform_indices = @transform_2, window_bounds = array<i64: 16, 1>}, {pipeline_mode = #tpu.pipeline_mode<synchronous>, transform_indices = @transform_3, window_bounds = array<i64: 16, 48>}, {pipeline_mode = #tpu.pipeline_mode<synchronous>, transform_indices = @transform_4, window_bounds = array<i64: 16, 1>}, {transform_indices = @transform_5, window_bounds = array<i64: 16, 256>}]} {
    %c0 = arith.constant 0 : index
    %c0_0 = arith.constant 0 : index
    %0 = vector.load %arg1[%c0, %c0_0] : memref<16x256xf32, #tpu.memory_space<vmem>>, vector<16x256xf32>
    %1 = tpu.iota {dimensions = array<i32: 1>} : vector<16x256xi32>
    %c16_i32 = arith.constant 16 : i32
    %c0_i32 = arith.constant 0 : i32
    %2 = arith.cmpi eq, %c16_i32, %c0_i32 : i32
    %c1_i32 = arith.constant 1 : i32
    %3 = arith.select %2, %c1_i32, %c16_i32 : i32
    %4 = vector.broadcast %3 : i32 to vector<16x256xi32>
    %5 = arith.remsi %1, %4 : vector<16x256xi32>
    %c0_i32_1 = arith.constant 0 : i32
    %6 = vector.broadcast %c0_i32_1 : i32 to vector<16x256xi32>
    %7 = arith.cmpi ne, %5, %6 : vector<16x256xi32>
    %c0_i32_2 = arith.constant 0 : i32
    %8 = vector.broadcast %c0_i32_2 : i32 to vector<16x256xi32>
    %9 = arith.cmpi slt, %5, %8 : vector<16x256xi32>
    %c0_i32_3 = arith.constant 0 : i32
    %10 = arith.cmpi slt, %3, %c0_i32_3 : i32
    %11 = vector.broadcast %10 : i1 to vector<16x256xi1>
    %12 = vector.broadcast %11 : vector<16x256xi1> to vector<16x256xi1>
    %13 = arith.xori %9, %12 : vector<16x256xi1>
    %14 = arith.andi %13, %7 : vector<16x256xi1>
    %15 = vector.broadcast %3 : i32 to vector<16x256xi32>
    %16 = arith.addi %5, %15 : vector<16x256xi32>
    %17 = arith.select %14, %16, %5 : vector<16x256xi1>, vector<16x256xi32>
    %c0_i32_4 = arith.constant 0 : i32
    %18 = vector.broadcast %c0_i32_4 : i32 to vector<16x256xi32>
    %19 = arith.cmpi ne, %17, %18 : vector<16x256xi32>
    %c15_i32 = arith.constant 15 : i32
    %20 = vector.broadcast %c15_i32 : i32 to vector<16x256xi32>
    %21 = arith.cmpi ne, %17, %20 : vector<16x256xi32>
    %c1_i32_5 = arith.constant 1 : i32
    %22 = tpu.dynamic_rotate %0 by %c1_i32_5 dim 1 : vector<16x256xf32>, i32 -> vector<16x256xf32>
    %cst = arith.constant 0.000000e+00 : f32
    %23 = vector.broadcast %cst : f32 to vector<16x256xf32>
    %24 = arith.select %19, %22, %23 : vector<16x256xi1>, vector<16x256xf32>
    %c0_6 = arith.constant 0 : index
    %c0_7 = arith.constant 0 : index
    %25 = vector.load %arg7[%c0_6, %c0_7] : memref<48x256xf32, #tpu.memory_space<vmem>>, vector<16x256xf32>
    tpu.vector_store %arg7[%c0_6, %c0_7], %24 {strides = array<i32>} : memref<48x256xf32, #tpu.memory_space<vmem>>, vector<16x256xf32>,
    %c16 = arith.constant 16 : index
    %c0_8 = arith.constant 0 : index
    %26 = vector.load %arg7[%c16, %c0_8] : memref<48x256xf32, #tpu.memory_space<vmem>>, vector<16x256xf32>
    tpu.vector_store %arg7[%c16, %c0_8], %0 {strides = array<i32>} : memref<48x256xf32, #tpu.memory_space<vmem>>, vector<16x256xf32>,
    %c255_i32 = arith.constant 255 : i32
    %27 = tpu.dynamic_rotate %0 by %c255_i32 dim 1 : vector<16x256xf32>, i32 -> vector<16x256xf32>
    %cst_9 = arith.constant 0.000000e+00 : f32
    %28 = vector.broadcast %cst_9 : f32 to vector<16x256xf32>
    %29 = arith.select %21, %27, %28 : vector<16x256xi1>, vector<16x256xf32>
    %c32 = arith.constant 32 : index
    %c0_10 = arith.constant 0 : index
    %30 = vector.load %arg7[%c32, %c0_10] : memref<48x256xf32, #tpu.memory_space<vmem>>, vector<16x256xf32>
    tpu.vector_store %arg7[%c32, %c0_10], %29 {strides = array<i32>} : memref<48x256xf32, #tpu.memory_space<vmem>>, vector<16x256xf32>,
    %c0_11 = arith.constant 0 : index
    %c0_12 = arith.constant 0 : index
    %31 = vector.load %arg2[%c0_11, %c0_12] : memref<16x48xf32, #tpu.memory_space<vmem>>, vector<16x48xf32>
    %c0_13 = arith.constant 0 : index
    %c0_14 = arith.constant 0 : index
    %32 = vector.load %arg7[%c0_13, %c0_14] : memref<48x256xf32, #tpu.memory_space<vmem>>, vector<48x256xf32>
    %cst_15 = arith.constant dense<0.000000e+00> : vector<16x256xf32>
    %33 = tpu.matmul %31, %32, %cst_15 {dimension_numbers = #tpu.dot_dimension_numbers<[1], [0], [0], [1], [0, 0, 1, 1], [], []>} : vector<16x48xf32>, vector<48x256xf32>, vector<16x256xf32> -> vector<16x256xf32>
    %c0_16 = arith.constant 0 : index
    %c0_17 = arith.constant 0 : index
    %34 = vector.load %arg3[%c0_16, %c0_17] : memref<16x1xf32, #tpu.memory_space<vmem>>, vector<16x1xf32>
    %35 = vector.broadcast %34 : vector<16x1xf32> to vector<16x256xf32>
    %36 = arith.addf %33, %35 : vector<16x256xf32>
    %cst_18 = arith.constant 0.000000e+00 : f32
    %37 = vector.broadcast %cst_18 : f32 to vector<16x256xf32>
    %38 = arith.maximumf %36, %37 : vector<16x256xf32>
    %c1_i32_19 = arith.constant 1 : i32
    %39 = tpu.dynamic_rotate %38 by %c1_i32_19 dim 1 : vector<16x256xf32>, i32 -> vector<16x256xf32>
    %cst_20 = arith.constant 0.000000e+00 : f32
    %40 = vector.broadcast %cst_20 : f32 to vector<16x256xf32>
    %41 = arith.select %19, %39, %40 : vector<16x256xi1>, vector<16x256xf32>
    %c0_21 = arith.constant 0 : index
    %c0_22 = arith.constant 0 : index
    %42 = vector.load %arg7[%c0_21, %c0_22] : memref<48x256xf32, #tpu.memory_space<vmem>>, vector<16x256xf32>
    tpu.vector_store %arg7[%c0_21, %c0_22], %41 {strides = array<i32>} : memref<48x256xf32, #tpu.memory_space<vmem>>, vector<16x256xf32>,
    %c16_23 = arith.constant 16 : index
    %c0_24 = arith.constant 0 : index
    %43 = vector.load %arg7[%c16_23, %c0_24] : memref<48x256xf32, #tpu.memory_space<vmem>>, vector<16x256xf32>
    tpu.vector_store %arg7[%c16_23, %c0_24], %38 {strides = array<i32>} : memref<48x256xf32, #tpu.memory_space<vmem>>, vector<16x256xf32>,
    %c255_i32_25 = arith.constant 255 : i32
    %44 = tpu.dynamic_rotate %38 by %c255_i32_25 dim 1 : vector<16x256xf32>, i32 -> vector<16x256xf32>
    %cst_26 = arith.constant 0.000000e+00 : f32
    %45 = vector.broadcast %cst_26 : f32 to vector<16x256xf32>
    %46 = arith.select %21, %44, %45 : vector<16x256xi1>, vector<16x256xf32>
    %c32_27 = arith.constant 32 : index
    %c0_28 = arith.constant 0 : index
    %47 = vector.load %arg7[%c32_27, %c0_28] : memref<48x256xf32, #tpu.memory_space<vmem>>, vector<16x256xf32>
    tpu.vector_store %arg7[%c32_27, %c0_28], %46 {strides = array<i32>} : memref<48x256xf32, #tpu.memory_space<vmem>>, vector<16x256xf32>,
    %c0_29 = arith.constant 0 : index
    %c0_30 = arith.constant 0 : index
    %48 = vector.load %arg4[%c0_29, %c0_30] : memref<16x48xf32, #tpu.memory_space<vmem>>, vector<16x48xf32>
    %c0_31 = arith.constant 0 : index
    %c0_32 = arith.constant 0 : index
    %49 = vector.load %arg7[%c0_31, %c0_32] : memref<48x256xf32, #tpu.memory_space<vmem>>, vector<48x256xf32>
    %cst_33 = arith.constant dense<0.000000e+00> : vector<16x256xf32>
    %50 = tpu.matmul %48, %49, %cst_33 {dimension_numbers = #tpu.dot_dimension_numbers<[1], [0], [0], [1], [0, 0, 1, 1], [], []>} : vector<16x48xf32>, vector<48x256xf32>, vector<16x256xf32> -> vector<16x256xf32>
    %c0_34 = arith.constant 0 : index
    %c0_35 = arith.constant 0 : index
    %51 = vector.load %arg5[%c0_34, %c0_35] : memref<16x1xf32, #tpu.memory_space<vmem>>, vector<16x1xf32>
    %52 = vector.broadcast %51 : vector<16x1xf32> to vector<16x256xf32>
    %53 = arith.addf %50, %52 : vector<16x256xf32>
    %54 = arith.addf %53, %0 : vector<16x256xf32>
    %cst_36 = arith.constant 0.000000e+00 : f32
    %55 = vector.broadcast %cst_36 : f32 to vector<16x256xf32>
    %56 = arith.maximumf %54, %55 : vector<16x256xf32>
    %c0_37 = arith.constant 0 : index
    %c0_38 = arith.constant 0 : index
    %57 = vector.load %arg6[%c0_37, %c0_38] : memref<16x256xf32, #tpu.memory_space<vmem>>, vector<16x256xf32>
    tpu.vector_store %arg6[%c0_37, %c0_38], %56 {strides = array<i32>} : memref<16x256xf32, #tpu.memory_space<vmem>>, vector<16x256xf32>,
    return
  }
  func.func @transform_0(%arg0: i32) -> (i32, i32) {
    %c0_i32 = arith.constant 0 : i32
    %c0_i32_0 = arith.constant 0 : i32
    return %c0_i32, %arg0 : i32, i32
  }
  func.func @transform_1(%arg0: i32) -> (i32, i32) {
    %c0_i32 = arith.constant 0 : i32
    %c0_i32_0 = arith.constant 0 : i32
    %c0_i32_1 = arith.constant 0 : i32
    return %c0_i32, %c0_i32_0 : i32, i32
  }
  func.func @transform_2(%arg0: i32) -> (i32, i32) {
    %c0_i32 = arith.constant 0 : i32
    %c0_i32_0 = arith.constant 0 : i32
    %c0_i32_1 = arith.constant 0 : i32
    return %c0_i32, %c0_i32_0 : i32, i32
  }
  func.func @transform_3(%arg0: i32) -> (i32, i32) {
    %c0_i32 = arith.constant 0 : i32
    %c0_i32_0 = arith.constant 0 : i32
    %c0_i32_1 = arith.constant 0 : i32
    return %c0_i32, %c0_i32_0 : i32, i32
  }
  func.func @transform_4(%arg0: i32) -> (i32, i32) {
    %c0_i32 = arith.constant 0 : i32
    %c0_i32_0 = arith.constant 0 : i32
    %c0_i32_1 = arith.constant 0 : i32
    return %c0_i32, %c0_i32_0 : i32, i32
  }
  func.func @transform_5(%arg0: i32) -> (i32, i32) {
    %c0_i32 = arith.constant 0 : i32
    %c0_i32_0 = arith.constant 0 : i32
    return %c0_i32, %arg0 : i32, i32
  }
}

</mosaic_0001>

<llo_original>
// kernel: tpu_custom_call.1
$region0: #{tpu_custom_call.1}
  #allocation0 [shape = 'u32[]', space=smem, size = 0x4, offset = 0x4, fixed_abs, tag = 'smem constant byte address 0x4 - core index']
  #allocation1 [shape = 'u32[144,128]{1,0:T(1,128)}', space=vmem, size = 0x12000, scoped, tag = 'internal scratch']
  #allocation2 [shape = 'f32[48,256]{1,0:T(8,128)}', space=vmem, size = 0xc000, scoped, tag = 'scratch operand']
  %s0 = inlined_call_operand.vmem [shape: f32[16,256], index: 0, kind: input, shape index: {}]
  %s1 = inlined_call_operand.hbm [shape: f32[16,48], index: 1, kind: input, shape index: {}]
  %s2 = inlined_call_operand.vmem [shape: f32[16,1], index: 2, kind: input, shape index: {}]
  %s3 = inlined_call_operand.hbm [shape: f32[16,48], index: 3, kind: input, shape index: {}]
  %s4 = inlined_call_operand.vmem [shape: f32[16,1], index: 4, kind: input, shape index: {}]
  %s5 = inlined_call_operand.hbm [shape: f32[16,256], index: 5, kind: output, shape index: {}]
  %s6 = sld [smem:[#allocation0]]
  $region38: #{tpu_custom_call.1} parent=0
    _
  %s8 = ssub.s32 1, %s6
  %s9 = scalar_select 0, %s8, %s6
  $region1: #{tpu_custom_call.1} parent=0
    #allocation3 [shape = 'u8[8192]{0}', space=vmem, size = 0x2000, scoped, tag = 'input window, operand 1, single buffered']
    #allocation4 [shape = 's32[1]{0}', space=sflag, size = 0x4, scoped, tag = 'scoped memory for tpu_custom_call.1']
    #allocation5 [shape = 's32[1]{0}', space=sflag, size = 0x4, scoped, tag = 'scoped memory for tpu_custom_call.1']
    #allocation6 [shape = 'u8[8192]{0}', space=vmem, size = 0x2000, scoped, tag = 'input window, operand 3, single buffered']
    #allocation7 [shape = 's32[1]{0}', space=sflag, size = 0x4, scoped, tag = 'scoped memory for tpu_custom_call.1']
    #allocation8 [shape = 'u8[16384]{0}', space=vmem, size = 0x4000, scoped, tag = 'output window, operand 0, single buffered']
    %10 = vsyncpa [#allocation4], 0
    %11 = vsyncpa [#allocation7], 0
    %12 = vsyncpa [#allocation5], 0
    // Predicated region
    $region2: #{tpu_custom_call.1} parent=1 // pred_check
      _
    $region3: #{tpu_custom_call.1} parent=1 // pred_check_branch
      %14 = sbr.rel (0) target = $region5
    $region4: #{tpu_custom_call.1} parent=1 // pred_region
      _
    $region5: #{tpu_custom_call.1} parent=1 // pred_fallthru
      _
    // Predicated region
    $region6: #{tpu_custom_call.1} parent=1 // pred_check
      _
    $region7: #{tpu_custom_call.1} parent=1 // pred_check_branch
      %16 = sbr.rel (0) target = $region9
    $region8: #{tpu_custom_call.1} parent=1 // pred_region
      %s18 = ssub.s32 256, 256
      %19 = vsyncadd [#allocation4], %s18
      %s20 = sshll.u32 [#allocation3], 4
      %s21 = int_to_ptr.vmem [resolvable:$true] %s20
      %26 = dma.hbm_to_vmem [thread:$0]  %s1, 256, %s21, [#allocation4], 128, 128, 8
    $region9: #{tpu_custom_call.1} parent=1 // pred_fallthru
      _
    // Predicated region
    $region10: #{tpu_custom_call.1} parent=1 // pred_check
      _
    $region11: #{tpu_custom_call.1} parent=1 // pred_check_branch
      %28 = sbr.rel (0) target = $region13
    $region12: #{tpu_custom_call.1} parent=1 // pred_region
      _
    $region13: #{tpu_custom_call.1} parent=1 // pred_fallthru
      _
    // Predicated region
    $region14: #{tpu_custom_call.1} parent=1 // pred_check
      _
    $region15: #{tpu_custom_call.1} parent=1 // pred_check_branch
      %30 = sbr.rel (0) target = $region17
    $region16: #{tpu_custom_call.1} parent=1 // pred_region
      %s32 = ssub.s32 256, 256
      %33 = vsyncadd [#allocation7], %s32
      %s34 = sshll.u32 [#allocation6], 4
      %s35 = int_to_ptr.vmem [resolvable:$true] %s34
      %40 = dma.hbm_to_vmem [thread:$0]  %s3, 256, %s35, [#allocation7], 128, 128, 8
    $region17: #{tpu_custom_call.1} parent=1 // pred_fallthru
      _
    // Predicated region
    $region18: #{tpu_custom_call.1} parent=1 // pred_check
      _
    $region19: #{tpu_custom_call.1} parent=1 // pred_check_branch
      %42 = sbr.rel (0) target = $region21
    $region20: #{tpu_custom_call.1} parent=1 // pred_region
      _
    $region21: #{tpu_custom_call.1} parent=1 // pred_fallthru
      _
    // Predicated region
    $region22: #{tpu_custom_call.1} parent=1 // pred_check
      _
    $region23: #{tpu_custom_call.1} parent=1 // pred_check_branch
      %44 = sbr.rel (0) target = $region25
    $region24: #{tpu_custom_call.1} parent=1 // pred_region
      %45 = dma.done [#allocation4], 256
    $region25: #{tpu_custom_call.1} parent=1 // pred_fallthru
      _
    // Predicated region
    $region26: #{tpu_custom_call.1} parent=1 // pred_check
      _
    $region27: #{tpu_custom_call.1} parent=1 // pred_check_branch
      %47 = sbr.rel (0) target = $region29
    $region28: #{tpu_custom_call.1} parent=1 // pred_region
      %48 = dma.done [#allocation7], 256
    $region29: #{tpu_custom_call.1} parent=1 // pred_fallthru
      _
    %v49 = vld [vmem:[%s0] sm:$0xff]
    %v50 = vld [vmem:[%s0 + $0x8] sm:$0xff]
    %v51 = vld [vmem:[%s0 + $0x10] sm:$0xff]
    %v52 = vld [vmem:[%s0 + $0x18] sm:$0xff]
    %v53 = vlaneseq
    %v54 = vand.u32 %v53, 127
    %v55 = vadd.s32 %v54, 128
    %vm56 = vcmp.lt.s32.totalorder %v54, 0
    %v57 = vsub.s32 0, %v54
    %v58 = vsel %vm56, %v57, %v54
    %v59 = vshrl.u32 %v58, 4
    %v60 = vand.u32 %v58, 15
    %v61 = vsub.s32 0, %v60
    %v62 = vsel %vm56, %v61, %v60
    %vm63 = vcmp.lt.s32.totalorder %v55, 0
    %v64 = vsub.s32 0, %v55
    %v65 = vsel %vm63, %v64, %v55
    %v66 = vshrl.u32 %v65, 4
    %v67 = vand.u32 %v65, 15
    %v68 = vsub.s32 0, %v67
    %v69 = vsel %vm63, %v68, %v67
    %vm70 = vcmp.ne.s32.totalorder %v62, 0
    %vm71 = vcmp.ne.s32.totalorder %v69, 0
    %vm72 = vcmp.lt.s32.totalorder %v62, 0
    %vm73 = vcmp.lt.s32.totalorder %v69, 0
    %vm74 = vmand %vm72, %vm70
    %vm75 = vmand %vm73, %vm71
    %v76 = vadd.s32 %v62, 16
    %v77 = vadd.s32 %v69, 16
    %v78 = vsel %vm74, %v76, %v62
    %v79 = vsel %vm75, %v77, %v69
    %vm80 = vcmp.ne.s32.totalorder %v78, 0
    %vm81 = vcmp.ne.s32.totalorder %v79, 0
    %vm82 = vcmp.ne.s32.totalorder %v78, 15
    %vm83 = vcmp.ne.s32.totalorder %v79, 15
    %84 = vrot.lane.b32.xlu0 %v49, 1
    %v85 = vpop.permute.xlu0 %84
    %86 = vrot.lane.b32.xlu0 %v51, 1
    %v87 = vpop.permute.xlu0 %86
    %88 = vrot.lane.b32.xlu0 %v50, 1
    %v89 = vpop.permute.xlu0 %88
    %90 = vrot.lane.b32.xlu0 %v52, 1
    %v91 = vpop.permute.xlu0 %90
    %vm92 = vcmp.lt.s32.totalorder %v54, 1
    %v93 = vsel %vm92, %v85, %v89
    %v94 = vsel %vm92, %v87, %v91
    %v95 = vsel %vm92, %v89, %v85
    %v96 = vsel %vm92, %v91, %v87
    %v97 = vsel %vm80, %v95, 0.0
    %v98 = vsel %vm81, %v93, 0.0
    %v99 = vsel %vm80, %v96, 0.0
    %v100 = vsel %vm81, %v94, 0.0
    %101 = vst [vmem:[#allocation2] sm:$0xff] %v97
    %102 = vst [vmem:[#allocation2 + $0x8] sm:$0xff] %v98
    %103 = vst [vmem:[#allocation2 + $0x10] sm:$0xff] %v99
    %104 = vst [vmem:[#allocation2 + $0x18] sm:$0xff] %v100
    %105 = vst [vmem:[#allocation2 + $0x20] sm:$0xff] %v49
    %106 = vst [vmem:[#allocation2 + $0x28] sm:$0xff] %v50
    %107 = vst [vmem:[#allocation2 + $0x30] sm:$0xff] %v51
    %108 = vst [vmem:[#allocation2 + $0x38] sm:$0xff] %v52
    %109 = vrot.lane.b32.xlu0 %v49, 127
    %v110 = vpop.permute.xlu0 %109
    %111 = vrot.lane.b32.xlu0 %v51, 127
    %v112 = vpop.permute.xlu0 %111
    %113 = vrot.lane.b32.xlu0 %v50, 127
    %v114 = vpop.permute.xlu0 %113
    %115 = vrot.lane.b32.xlu0 %v52, 127
    %v116 = vpop.permute.xlu0 %115
    %vm117 = vcmp.lt.s32.totalorder %v54, 127
    %v118 = vsel %vm117, %v110, %v114
    %v119 = vsel %vm117, %v112, %v116
    %v120 = vsel %vm117, %v114, %v110
    %v121 = vsel %vm117, %v116, %v112
    %v122 = vsel %vm82, %v118, 0.0
    %v123 = vsel %vm83, %v120, 0.0
    %v124 = vsel %vm82, %v119, 0.0
    %v125 = vsel %vm83, %v121, 0.0
    %126 = vst [vmem:[#allocation2 + $0x40] sm:$0xff] %v122
    %127 = vst [vmem:[#allocation2 + $0x48] sm:$0xff] %v123
    %128 = vst [vmem:[#allocation2 + $0x50] sm:$0xff] %v124
    %129 = vst [vmem:[#allocation2 + $0x58] sm:$0xff] %v125
    %v130 = vld [vmem:[#allocation3] sm:$0xff]
    %v131 = vld [vmem:[#allocation3 + $0x8] sm:$0xff]
    %v132 = vld [vmem:[#allocation2] sm:$0xff]
    %v133 = vld [vmem:[#allocation2 + $0x8] sm:$0xff]
    %v134 = vld [vmem:[#allocation2 + $0x10] sm:$0xff]
    %v135 = vld [vmem:[#allocation2 + $0x18] sm:$0xff]
    %v136 = vld [vmem:[#allocation2 + $0x20] sm:$0xff]
    %v137 = vld [vmem:[#allocation2 + $0x28] sm:$0xff]
    %v138 = vld [vmem:[#allocation2 + $0x30] sm:$0xff]
    %v139 = vld [vmem:[#allocation2 + $0x38] sm:$0xff]
    %v140 = vld [vmem:[#allocation2 + $0x40] sm:$0xff]
    %v141 = vld [vmem:[#allocation2 + $0x48] sm:$0xff]
    %v142 = vld [vmem:[#allocation2 + $0x50] sm:$0xff]
    %v143 = vld [vmem:[#allocation2 + $0x58] sm:$0xff]
    %v144 = vld [vmem:[%s2] sm:$0xff]
    %v145 = vld [vmem:[%s2 + $0x8] sm:$0xff]
    %147 = vset.pattern.permute.xlu0 0
    %148 = vperm.xlu0 %147, %v144
    %v149 = vpop.permute.xlu0 %148
    %152 = vset.pattern.permute.xlu0 0
    %153 = vperm.xlu0 %152, %v145
    %v154 = vpop.permute.xlu0 %153
    %vm156 = vcmask 392192
    %v158 = vsel %vm156, %v130, 0
    %v161 = vsel %vm156, %v131, 0
    %163 = vmatprep.subr.mxu0 0.0
    %164 = vmatpush1.msra.mxu0 0.0
    %165 = vmatprep.subr.mxu0 0.0
    %166 = vmatpush1.msra.mxu0 0.0
    %167 = vmatprep.subr.mxu0 0.0
    %168 = vmatpush1.msra.mxu0 0.0
    %169 = vmatprep.subr.mxu0 0.0
    %170 = vmatpush1.msra.mxu0 0.0
    %171 = vmatprep.subr.mxu0 0.0
    %172 = vmatpush1.msra.mxu0 0.0
    %173 = vmatprep.subr.mxu0 0.0
    %174 = vmatpush1.msra.mxu0 0.0
    %175 = vmatprep.subr.mxu0 0.0
    %176 = vmatpush1.msra.mxu0 0.0
    %177 = vmatprep.subr.mxu0 0.0
    %178 = vmatpush1.msra.mxu0 0.0
    %179 = vmatprep.subr.mxu0 0.0
    %180 = vmatpush1.msra.mxu0 0.0
    %181 = vmatprep.subr.mxu0 0.0
    %182 = vmatpush1.msra.mxu0 0.0
    %183 = vmatprep.subr.mxu0 %v143
    %184 = vmatpush1.msra.mxu0 %v142
    %185 = vmatprep.subr.mxu0 %v141
    %186 = vmatpush1.msra.mxu0 %v140
    %187 = vmatprep.subr.mxu0 %v139
    %188 = vmatpush1.msra.mxu0 %v138
    %189 = vmatprep.subr.mxu0 %v137
    %190 = vmatpush1.msra.mxu0 %v136
    %191 = vmatprep.subr.mxu0 %v135
    %192 = vmatpush1.msra.mxu0 %v134
    %193 = vmatprep.subr.mxu0 %v133
    %194 = vmatpush1.msra.mxu0 %v132
    %195 = vmatprep.subr.mxu0 0.0
    %196 = vmatpush2.msra.mxu0 0.0
    %197 = vmatprep.subr.mxu0 0.0
    %198 = vmatpush2.msra.mxu0 0.0
    %199 = vmatprep.subr.mxu0 0.0
    %200 = vmatpush2.msra.mxu0 0.0
    %201 = vmatprep.subr.mxu0 0.0
    %202 = vmatpush2.msra.mxu0 0.0
    %203 = vmatprep.subr.mxu0 0.0
    %204 = vmatpush2.msra.mxu0 0.0
    %205 = vmatprep.subr.mxu0 0.0
    %206 = vmatpush2.msra.mxu0 0.0
    %207 = vmatprep.subr.mxu0 0.0
    %208 = vmatpush2.msra.mxu0 0.0
    %209 = vmatprep.subr.mxu0 0.0
    %210 = vmatpush2.msra.mxu0 0.0
    %211 = vmatprep.subr.mxu0 0.0
    %212 = vmatpush2.msra.mxu0 0.0
    %213 = vmatprep.subr.mxu0 0.0
    %214 = vmatpush2.msra.mxu0 0.0
    %215 = vmatprep.subr.mxu0 0.0
    %216 = vmatpush2.msra.mxu0 0.0
    %217 = vmatprep.subr.mxu0 0.0
    %218 = vmatpush2.msra.mxu0 0.0
    %219 = vmatprep.subr.mxu0 0.0
    %220 = vmatpush2.msra.mxu0 0.0
    %221 = vmatprep.subr.mxu0 0.0
    %222 = vmatpush2.msra.mxu0 0.0
    %223 = vmatprep.subr.mxu0 0.0
    %224 = vmatpush2.msra.mxu0 0.0
    %225 = vmatprep.subr.mxu0 0.0
    %226 = vmatpush2.msra.mxu0 0.0
    %227 = vmatprep.mubr.f32.mxu0 0.0
    %228 = vmatmul.mubr.f32.gmra.mxu0 %v158
    %v229 = vpop.f32.mrf.mxu0
    %v230 = vadd.f32 %v149, %v229
    %v231 = vpop.f32.mrf.mxu0
    %v232 = vadd.f32 %v149, %v231
    %233 = vmatprep.mubr.f32.mxu0 0.0
    %234 = vmatmul.mubr.f32.gmra.mxu0 %v161
    %v235 = vpop.f32.mrf.mxu0
    %v236 = vadd.f32 %v154, %v235
    %v237 = vpop.f32.mrf.mxu0
    %v238 = vadd.f32 %v154, %v237
    %239 = vdwg.mxu0
    %v240 = vmax.f32 %v230, 0.0
    %v241 = vmax.f32 %v232, 0.0
    %v242 = vmax.f32 %v236, 0.0
    %v243 = vmax.f32 %v238, 0.0
    %244 = vrot.lane.b32.xlu0 %v240, 1
    %v245 = vpop.permute.xlu0 %244
    %246 = vrot.lane.b32.xlu0 %v242, 1
    %v247 = vpop.permute.xlu0 %246
    %248 = vrot.lane.b32.xlu0 %v241, 1
    %v249 = vpop.permute.xlu0 %248
    %250 = vrot.lane.b32.xlu0 %v243, 1
    %v251 = vpop.permute.xlu0 %250
    %v252 = vsel %vm92, %v245, %v249
    %v253 = vsel %vm92, %v247, %v251
    %v254 = vsel %vm92, %v249, %v245
    %v255 = vsel %vm92, %v251, %v247
    %v256 = vsel %vm80, %v254, 0.0
    %v257 = vsel %vm81, %v252, 0.0
    %v258 = vsel %vm80, %v255, 0.0
    %v259 = vsel %vm81, %v253, 0.0
    %260 = vst [vmem:[#allocation2] sm:$0xff] %v256
    %261 = vst [vmem:[#allocation2 + $0x8] sm:$0xff] %v257
    %262 = vst [vmem:[#allocation2 + $0x10] sm:$0xff] %v258
    %263 = vst [vmem:[#allocation2 + $0x18] sm:$0xff] %v259
    %264 = vst [vmem:[#allocation2 + $0x20] sm:$0xff] %v240
    %265 = vst [vmem:[#allocation2 + $0x28] sm:$0xff] %v241
    %266 = vst [vmem:[#allocation2 + $0x30] sm:$0xff] %v242
    %267 = vst [vmem:[#allocation2 + $0x38] sm:$0xff] %v243
    %268 = vrot.lane.b32.xlu0 %v240, 127
    %v269 = vpop.permute.xlu0 %268
    %270 = vrot.lane.b32.xlu0 %v242, 127
    %v271 = vpop.permute.xlu0 %270
    %272 = vrot.lane.b32.xlu0 %v241, 127
    %v273 = vpop.permute.xlu0 %272
    %274 = vrot.lane.b32.xlu0 %v243, 127
    %v275 = vpop.permute.xlu0 %274
    %v276 = vsel %vm117, %v269, %v273
    %v277 = vsel %vm117, %v271, %v275
    %v278 = vsel %vm117, %v273, %v269
    %v279 = vsel %vm117, %v275, %v271
    %v280 = vsel %vm82, %v276, 0.0
    %v281 = vsel %vm83, %v278, 0.0
    %v282 = vsel %vm82, %v277, 0.0
    %v283 = vsel %vm83, %v279, 0.0
    %284 = vst [vmem:[#allocation2 + $0x40] sm:$0xff] %v280
    %285 = vst [vmem:[#allocation2 + $0x48] sm:$0xff] %v281
    %286 = vst [vmem:[#allocation2 + $0x50] sm:$0xff] %v282
    %287 = vst [vmem:[#allocation2 + $0x58] sm:$0xff] %v283
    %v288 = vld [vmem:[#allocation6] sm:$0xff]
    %v289 = vld [vmem:[#allocation6 + $0x8] sm:$0xff]
    %v290 = vld [vmem:[#allocation2] sm:$0xff]
    %v291 = vld [vmem:[#allocation2 + $0x8] sm:$0xff]
    %v292 = vld [vmem:[#allocation2 + $0x10] sm:$0xff]
    %v293 = vld [vmem:[#allocation2 + $0x18] sm:$0xff]
    %v294 = vld [vmem:[#allocation2 + $0x20] sm:$0xff]
    %v295 = vld [vmem:[#allocation2 + $0x28] sm:$0xff]
    %v296 = vld [vmem:[#allocation2 + $0x30] sm:$0xff]
    %v297 = vld [vmem:[#allocation2 + $0x38] sm:$0xff]
    %v298 = vld [vmem:[#allocation2 + $0x40] sm:$0xff]
    %v299 = vld [vmem:[#allocation2 + $0x48] sm:$0xff]
    %v300 = vld [vmem:[#allocation2 + $0x50] sm:$0xff]
    %v301 = vld [vmem:[#allocation2 + $0x58] sm:$0xff]
    %v302 = vld [vmem:[%s4] sm:$0xff]
    %v303 = vld [vmem:[%s4 + $0x8] sm:$0xff]
    %305 = vset.pattern.permute.xlu0 0
    %306 = vperm.xlu0 %305, %v302
    %v307 = vpop.permute.xlu0 %306
    %310 = vset.pattern.permute.xlu0 0
    %311 = vperm.xlu0 %310, %v303
    %v312 = vpop.permute.xlu0 %311
    %v315 = vsel %vm156, %v288, 0
    %v318 = vsel %vm156, %v289, 0
    %320 = vmatprep.subr.mxu0 0.0
    %321 = vmatpush1.msra.mxu0 0.0
    %322 = vmatprep.subr.mxu0 0.0
    %323 = vmatpush1.msra.mxu0 0.0
    %324 = vmatprep.subr.mxu0 0.0
    %325 = vmatpush1.msra.mxu0 0.0
    %326 = vmatprep.subr.mxu0 0.0
    %327 = vmatpush1.msra.mxu0 0.0
    %328 = vmatprep.subr.mxu0 0.0
    %329 = vmatpush1.msra.mxu0 0.0
    %330 = vmatprep.subr.mxu0 0.0
    %331 = vmatpush1.msra.mxu0 0.0
    %332 = vmatprep.subr.mxu0 0.0
    %333 = vmatpush1.msra.mxu0 0.0
    %334 = vmatprep.subr.mxu0 0.0
    %335 = vmatpush1.msra.mxu0 0.0
    %336 = vmatprep.subr.mxu0 0.0
    %337 = vmatpush1.msra.mxu0 0.0
    %338 = vmatprep.subr.mxu0 0.0
    %339 = vmatpush1.msra.mxu0 0.0
    %340 = vmatprep.subr.mxu0 %v301
    %341 = vmatpush1.msra.mxu0 %v300
    %342 = vmatprep.subr.mxu0 %v299
    %343 = vmatpush1.msra.mxu0 %v298
    %344 = vmatprep.subr.mxu0 %v297
    %345 = vmatpush1.msra.mxu0 %v296
    %346 = vmatprep.subr.mxu0 %v295
    %347 = vmatpush1.msra.mxu0 %v294
    %348 = vmatprep.subr.mxu0 %v293
    %349 = vmatpush1.msra.mxu0 %v292
    %350 = vmatprep.subr.mxu0 %v291
    %351 = vmatpush1.msra.mxu0 %v290
    %352 = vmatprep.subr.mxu0 0.0
    %353 = vmatpush2.msra.mxu0 0.0
    %354 = vmatprep.subr.mxu0 0.0
    %355 = vmatpush2.msra.mxu0 0.0
    %356 = vmatprep.subr.mxu0 0.0
    %357 = vmatpush2.msra.mxu0 0.0
    %358 = vmatprep.subr.mxu0 0.0
    %359 = vmatpush2.msra.mxu0 0.0
    %360 = vmatprep.subr.mxu0 0.0
    %361 = vmatpush2.msra.mxu0 0.0
    %362 = vmatprep.subr.mxu0 0.0
    %363 = vmatpush2.msra.mxu0 0.0
    %364 = vmatprep.subr.mxu0 0.0
    %365 = vmatpush2.msra.mxu0 0.0
    %366 = vmatprep.subr.mxu0 0.0
    %367 = vmatpush2.msra.mxu0 0.0
    %368 = vmatprep.subr.mxu0 0.0
    %369 = vmatpush2.msra.mxu0 0.0
    %370 = vmatprep.subr.mxu0 0.0
    %371 = vmatpush2.msra.mxu0 0.0
    %372 = vmatprep.subr.mxu0 0.0
    %373 = vmatpush2.msra.mxu0 0.0
    %374 = vmatprep.subr.mxu0 0.0
    %375 = vmatpush2.msra.mxu0 0.0
    %376 = vmatprep.subr.mxu0 0.0
    %377 = vmatpush2.msra.mxu0 0.0
    %378 = vmatprep.subr.mxu0 0.0
    %379 = vmatpush2.msra.mxu0 0.0
    %380 = vmatprep.subr.mxu0 0.0
    %381 = vmatpush2.msra.mxu0 0.0
    %382 = vmatprep.subr.mxu0 0.0
    %383 = vmatpush2.msra.mxu0 0.0
    %384 = vmatprep.mubr.f32.mxu0 0.0
    %385 = vmatmul.mubr.f32.gmra.mxu0 %v315
    %v386 = vpop.f32.mrf.mxu0
    %v387 = vadd.f32 %v307, %v386
    %v388 = vpop.f32.mrf.mxu0
    %v389 = vadd.f32 %v307, %v388
    %390 = vmatprep.mubr.f32.mxu0 0.0
    %391 = vmatmul.mubr.f32.gmra.mxu0 %v318
    %v392 = vpop.f32.mrf.mxu0
    %v393 = vadd.f32 %v312, %v392
    %v394 = vpop.f32.mrf.mxu0
    %v395 = vadd.f32 %v312, %v394
    %396 = vdwg.mxu0
    %v397 = vadd.f32 %v387, %v49
    %v398 = vadd.f32 %v389, %v50
    %v399 = vadd.f32 %v393, %v51
    %v400 = vadd.f32 %v395, %v52
    %v401 = vmax.f32 %v397, 0.0
    %v402 = vmax.f32 %v398, 0.0
    %v403 = vmax.f32 %v399, 0.0
    %v404 = vmax.f32 %v400, 0.0
    %405 = vst [vmem:[#allocation8] sm:$0xff] %v401
    %406 = vst [vmem:[#allocation8 + $0x8] sm:$0xff] %v402
    %407 = vst [vmem:[#allocation8 + $0x10] sm:$0xff] %v403
    %408 = vst [vmem:[#allocation8 + $0x18] sm:$0xff] %v404
    // Predicated region
    $region30: #{tpu_custom_call.1} parent=1 // pred_check
      _
    $region31: #{tpu_custom_call.1} parent=1 // pred_check_branch
      %410 = sbr.rel (0) target = $region33
    $region32: #{tpu_custom_call.1} parent=1 // pred_region
      %s412 = ssub.s32 512, 512
      %413 = vsyncadd [#allocation5], %s412
      %s414 = sshll.u32 [#allocation8], 4
      %s415 = int_to_ptr.vmem [resolvable:$true] %s414
      %420 = dma.vmem_to_hbm [thread:$0]  %s415, 512, %s5, [#allocation5], 256, 256, 16
    $region33: #{tpu_custom_call.1} parent=1 // pred_fallthru
      _
    // Predicated region
    $region34: #{tpu_custom_call.1} parent=1 // pred_check
      _
    $region35: #{tpu_custom_call.1} parent=1 // pred_check_branch
      %422 = sbr.rel (0) target = $region37
    $region36: #{tpu_custom_call.1} parent=1 // pred_region
      %423 = dma.done [#allocation5], 512
    $region37: #{tpu_custom_call.1} parent=1 // pred_fallthru
      _
    %424 = vsyncpa [#allocation4], 1
    %425 = vsyncpa [#allocation7], 1
    %426 = vsyncpa [#allocation5], 1

</llo_original>
